<compile_context>
chip_gen: v5e
topology: v5e:2x2
jax: 0.10.0
libtpu: 0.0.40
codegen_flags: <defaults>
</compile_context>

<pallas_src>
import math
import numpy as np
import jax
import jax.numpy as jnp
from jax import lax
from jax.experimental import pallas as pl
from jax.experimental.pallas import tpu as pltpu

LANE = 128  # TPU lane width; every stored slab is a full, aligned 128-lane block

# --- Cody-Waite constants for reducing phases mod 2*pi in f32 ----------------
_TWO_PI = np.float32(2.0 * math.pi)
_PI2_1 = np.float32(6.28125)                                   # few-bit head of 2*pi
_PI2_2 = np.float32(2.0 * math.pi - 6.28125)
_PI2_3 = np.float32(2.0 * math.pi - 6.28125 - float(np.float32(2.0 * math.pi - 6.28125)))


def _wrap_phase(w, p):
    """(w * p) mod 2*pi for integer-valued p, keeping the fractional phase accurate.

    w is split into a ~12-bit head (so w_hi * p is (near-)exact for the integer
    multiples used here) plus a tail; the large head product is reduced with a
    3-term Cody-Waite subtraction.  All f32 / wrapper-side (XLA) work.
    """
    w = jnp.asarray(w, jnp.float32)
    p = jnp.asarray(p, jnp.float32)
    bits = jax.lax.bitcast_convert_type(w, jnp.uint32) & np.uint32(0xFFFFF000)
    w_hi = jax.lax.bitcast_convert_type(bits, jnp.float32)     # top ~12 mantissa bits
    w_lo = w - w_hi                                            # exact (Sterbenz)
    ph = w_hi * p
    k = jnp.round(ph / _TWO_PI)
    red = ((ph - k * _PI2_1) - k * _PI2_2) - k * _PI2_3
    return red + w_lo * p


# -----------------------------------------------------------------------------
# Pallas kernel: one (Cn, th, TL) output tile.
#   wr/wi:  (1, Cn*th, th*N)   block-diagonal 2*Re(C_eff) / 2*Im(C_eff)
#   br/bi:  (1, th*N, 128)     base table exp(dtA*r), r in [0,128)
#   sr/si:  (1, NB, th*N)      per-128-lane-block scales exp(dtA*128*g)
#   k_ref:  (Cn, th, TL)       output tile (float32)
# -----------------------------------------------------------------------------
def _log_vandermonde_kernel(wr_ref, wi_ref, br_ref, bi_ref, sr_ref, si_ref, k_ref):
    Cn, th, TL = k_ref.shape
    NB = TL // LANE

    # Loop-invariant contraction weights: only a few vregs, safe to keep live.
    wr = wr_ref[0]                       # (Cn*th, th*N)
    wi = wi_ref[0]

    def body(q, carry):
        # tiny per-block complex scale, broadcast down the Cn*th weight rows
        sr = sr_ref[0, pl.ds(q, 1), :]   # (1, th*N)
        si = si_ref[0, pl.ds(q, 1), :]
        lhs_re = wr * sr - wi * si       # (Cn*th, th*N)  -- VPU, ~a dozen vreg ops
        lhs_im = -(wr * si + wi * sr)
        # N-contraction for all channels at once on the MXU (block-diagonal lhs);
        # base tables are read from VMEM inside the body so nothing big stays live.
        out = (jnp.dot(lhs_re, br_ref[0], preferred_element_type=jnp.float32)
               + jnp.dot(lhs_im, bi_ref[0], preferred_element_type=jnp.float32))
        off = pl.multiple_of(q * LANE, LANE)
        k_ref[:, :, pl.ds(off, LANE)] = out.reshape(Cn, th, LANE)  # lane-dense store
        return carry

    lax.fori_loop(0, NB, body, 0, unroll=2 if NB % 2 == 0 else 1)


def log_vandermonde_pallas(C_eff, dtA, L, *, th=8, tl_max=4096):
    """2*Re( einsum('chn,hnl->chl', C_eff, exp(dtA[:,:,None]*arange(L))) ) -> (Cn,H,L) f32.

    C_eff: (channels, H, N) complex64,  dtA: (H, N) complex64.
    th must be a multiple of 8; it is kept small because the block-diagonal MXU
    contraction's wasted MACs grow linearly with th -- grid-step overhead is
    amortized through the L tile size (tl_max) instead.
    """
    Cn, H, N = C_eff.shape
    assert th % 8 == 0
    cr = jnp.real(C_eff).astype(jnp.float32)
    ci = jnp.imag(C_eff).astype(jnp.float32)
    ar = jnp.real(dtA).astype(jnp.float32)
    ai = jnp.imag(dtA).astype(jnp.float32)

    # pad H to a multiple of th (zero rows contribute zero; sliced off below)
    Hp = pl.cdiv(H, th) * th
    if Hp != H:
        ph_ = Hp - H
        cr = jnp.pad(cr, ((0, 0), (0, ph_), (0, 0)))
        ci = jnp.pad(ci, ((0, 0), (0, ph_), (0, 0)))
        ar = jnp.pad(ar, ((0, ph_), (0, 0)))
        ai = jnp.pad(ai, ((0, ph_), (0, 0)))
    Hb = Hp // th

    # lane-dense L tiles (multiples of 128); pad L and slice after the call
    Lpad = pl.cdiv(L, LANE) * LANE
    if Lpad <= tl_max:
        TL = Lpad
        # v7x: a 1x1 grid would leave the second TensorCore idle -- split L in two
        # when that keeps the per-block count a multiple of 8.
        if Hb == 1 and TL >= 2048 and TL % 2048 == 0:
            TL = TL // 2
    else:
        TL = tl_max
    Lp = pl.cdiv(Lpad, TL) * TL
    NB = TL // LANE            # 128-lane blocks per tile
    NBtot = Lp // LANE         # 128-lane blocks total
    thN = th * N

    # ---- block-diagonal contraction weights (Hb, Cn*th, th*N) ----------------
    # row (c*th + h) has 2*cr / 2*ci in columns [h*N, (h+1)*N), zeros elsewhere
    eye = jnp.eye(th, dtype=jnp.float32)
    crt = cr.reshape(Cn, Hb, th, N).transpose(1, 0, 2, 3)       # (Hb, Cn, th, N)
    cit = ci.reshape(Cn, Hb, th, N).transpose(1, 0, 2, 3)
    wr = (2.0 * crt[:, :, :, None, :] * eye[None, None, :, :, None]).reshape(Hb, Cn * th, thN)
    wi = (2.0 * cit[:, :, :, None, :] * eye[None, None, :, :, None]).reshape(Hb, Cn * th, thN)

    arf = ar.reshape(Hb, thN)
    aif = ai.reshape(Hb, thN)

    # ---- base table exp(dtA*r), r in [0,128): (Hb, th*N, 128) ----------------
    r = jnp.arange(LANE, dtype=jnp.float32)
    bmag = jnp.exp(arf[:, :, None] * r)
    bph = _wrap_phase(aif[:, :, None], r)
    base_r = bmag * jnp.cos(bph)
    base_i = bmag * jnp.sin(bph)

    # ---- per-block scales exp(dtA*128*g): (Hb, NBtot, th*N) ------------------
    p = (LANE * jnp.arange(NBtot, dtype=jnp.int32)).astype(jnp.float32)
    smag = jnp.exp(arf[:, None, :] * p[None, :, None])
    sph = _wrap_phase(aif[:, None, :], p[None, :, None])
    scale_r = smag * jnp.cos(sph)
    scale_i = smag * jnp.sin(sph)

    grid = (Hb, Lp // TL)      # h outer, l inner: weight/base blocks re-used across l
    out = pl.pallas_call(
        _log_vandermonde_kernel,
        out_shape=jax.ShapeDtypeStruct((Cn, Hp, Lp), jnp.float32),
        grid_spec=pltpu.PrefetchScalarGridSpec(
            num_scalar_prefetch=0,
            grid=grid,
            in_specs=[
                pl.BlockSpec((1, Cn * th, thN), lambda i, j: (i, 0, 0)),   # wr
                pl.BlockSpec((1, Cn * th, thN), lambda i, j: (i, 0, 0)),   # wi
                pl.BlockSpec((1, thN, LANE), lambda i, j: (i, 0, 0)),      # base_r
                pl.BlockSpec((1, thN, LANE), lambda i, j: (i, 0, 0)),      # base_i
                pl.BlockSpec((1, NB, thN), lambda i, j: (i, j, 0)),        # scale_r
                pl.BlockSpec((1, NB, thN), lambda i, j: (i, j, 0)),        # scale_i
            ],
            out_specs=pl.BlockSpec((Cn, th, TL), lambda i, j: (0, i, j)),
        ),
        compiler_params=pltpu.CompilerParams(
            dimension_semantics=("parallel", "parallel"),
        ),
    )(wr, wi, base_r, base_i, scale_r, scale_i)
    return out[:, :H, :L]


# -----------------------------------------------------------------------------
# SSKernelDiag (forward only, disc='zoh', real_type='exp', state=None).
# Parameter prep is plain-JAX glue; the Vandermonde contraction is the Pallas kernel.
# -----------------------------------------------------------------------------
class SSKernelDiagJAX:
    def __init__(self, A, B, C, log_dt, disc="zoh", real_type="exp"):
        # A: (n_ssm, N) complex, B: (n_ssm, N) complex, C: (channels, H, N) complex
        # log_dt: (H,)
        assert A.shape[-1] == C.shape[-1]
        assert A.shape[-2] == B.shape[-2]
        self.H = log_dt.shape[-1]
        self.N = A.shape[-1]
        self.n_ssm = A.shape[-2]
        assert self.H % self.n_ssm == 0
        self.repeat = self.H // A.shape[0]
        self.channels = C.shape[0]
        self.disc = disc
        self.real_type = real_type

        self.C = C.astype(jnp.complex64)                      # (channels, H, N)
        self.B = B.astype(jnp.complex64)                      # (n_ssm, N)
        self.log_dt = log_dt.astype(jnp.float32)              # (H,)
        A_real = jnp.minimum(jnp.real(A), -1e-4)              # clamp(max=-1e-4)
        assert real_type == "exp"
        self.inv_A_real = jnp.log(-A_real).astype(jnp.float32)   # (n_ssm, N)
        self.A_imag = jnp.imag(A).astype(jnp.float32)             # (n_ssm, N)

    def _A(self):
        A_real = -jnp.exp(self.inv_A_real)
        return (A_real + 1j * self.A_imag).astype(jnp.complex64)  # (n_ssm, N)

    def forward(self, L, rate=1.0):
        # TODO(synk): initial-state (K_state) path, bandlimit mask, and the
        # 'bilinear'/'dss' discretizations are not implemented; only disc='zoh',
        # real_type='exp', state=None.
        dt = jnp.exp(self.log_dt) * rate                          # (H,)
        C = self.C                                                # (channels, H, N)
        A = self._A()                                             # (n_ssm, N)

        # repeat(B, 't n -> 1 (v t) n', v=repeat)
        B = jnp.tile(self.B, (self.repeat, 1))[None]              # (1, H, N)
        # repeat(A, 't n -> (v t) n', v=repeat)
        A = jnp.tile(A, (self.repeat, 1))                         # (H, N)

        dtA = A * dt[:, None].astype(jnp.complex64)               # (H, N)

        # C = (B[:, None, :, :] * C).view(-1, H, N)
        C_eff = (B[:, None, :, :] * C[None]).reshape(-1, self.H, self.N)   # (channels, H, N)

        assert self.disc == "zoh"
        C_eff = C_eff * (jnp.exp(dtA) - 1.0) / A                  # (channels, H, N)

        # hot path: log_vandermonde in the Pallas kernel
        K = log_vandermonde_pallas(C_eff, dtA, L)                 # (channels, H, L)

        K = K.reshape(-1, self.channels, self.H, L)
        K_state = None                                            # no initial state
        K = K[-1]                                                 # (channels, H, L)
        return K, K_state


# -----------------------------------------------------------------------------
# Pure-JAX reference (elementwise + sum) for checking.
# -----------------------------------------------------------------------------
def log_vandermonde_ref(C_eff, dtA, L):
    l_idx = jnp.arange(L, dtype=jnp.float32).astype(jnp.complex64)
    V = jnp.exp(dtA[:, :, None] * l_idx)                       # (H, N, L) complex
    K = jnp.sum(C_eff[:, :, :, None] * V[None], axis=2)        # (Cn, H, L) complex
    return 2.0 * jnp.real(K)


if __name__ == "__main__":
    # Small synthetic config: H=8 features, N=32 state size, n_ssm=4 (repeat=2), channels=2.
    H, N, n_ssm, channels = 8, 32, 4, 2

    key = jax.random.PRNGKey(0)
    k_dt, k_c_re, k_c_im = jax.random.split(key, 3)

    # S4D-style deterministic init
    dt_min, dt_max = 1e-3, 3e-2
    log_dt = jax.random.uniform(k_dt, (H,)) * (math.log(dt_max) - math.log(dt_min)) \
        + math.log(dt_min)                                                    # (H,)
    A = (-0.5 * jnp.ones((n_ssm, N))
         + 1j * (math.pi * jnp.arange(N, dtype=jnp.float32))[None, :]).astype(jnp.complex64)
    B = jnp.ones((n_ssm, N), dtype=jnp.complex64)
    C = (jax.random.normal(k_c_re, (channels, H, N))
         + 1j * jax.random.normal(k_c_im, (channels, H, N))).astype(jnp.complex64)

    mod = SSKernelDiagJAX(A, B, C, log_dt, disc="zoh", real_type="exp")

    def reference_K(mod, L):
        dt = jnp.exp(mod.log_dt)
        A_rep = jnp.tile(mod._A(), (mod.repeat, 1))
        dtA = A_rep * dt[:, None].astype(jnp.complex64)
        B_rep = jnp.tile(mod.B, (mod.repeat, 1))[None]
        C_eff = (B_rep[:, None, :, :] * mod.C[None]).reshape(-1, mod.H, mod.N)
        C_eff = C_eff * (jnp.exp(dtA) - 1.0) / A_rep
        return log_vandermonde_ref(C_eff, dtA, L)

    # L=16 : single lane block, exercises L padding/slicing.
    # L=300: several lane blocks in one tile (NB not a power of 2).
    # L=5000: multiple L tiles (grid > 1 along l) plus tail padding.
    # Tolerance: with full-f32 MXU passes the kernel matches to ~1e-5; 1e-2 keeps
    # headroom for generations/compilers that run f32 matmuls as reduced-precision
    # MXU passes.
    for L in (16, 300, 5000):
        K, K_state = mod.forward(L)
        K = jax.block_until_ready(K)
        assert K.shape == (channels, H, L) and K.dtype == jnp.float32
        assert K_state is None
        K_ref = reference_K(mod, L)
        np.testing.assert_allclose(np.asarray(K), np.asarray(K_ref), rtol=1e-2, atol=1e-2)

    print("KERNEL_OK")
</pallas_src>

<mosaic_0001>
module attributes {stable_mosaic.version = 11 : i64} {
  func.func @_log_vandermonde_kernel(%arg0: i32, %arg1: i32, %arg2: memref<1x16x256xf32, #tpu.memory_space<vmem>>, %arg3: memref<1x16x256xf32, #tpu.memory_space<vmem>>, %arg4: memref<1x256x128xf32, #tpu.memory_space<vmem>>, %arg5: memref<1x256x128xf32, #tpu.memory_space<vmem>>, %arg6: memref<1x1x256xf32, #tpu.memory_space<vmem>>, %arg7: memref<1x1x256xf32, #tpu.memory_space<vmem>>, %arg8: memref<2x8x128xf32, #tpu.memory_space<vmem>>) attributes {dimension_semantics = [#tpu.dimension_semantics<parallel>, #tpu.dimension_semantics<parallel>], iteration_bounds = array<i64: 1, 1>, scalar_prefetch = 0 : i64, scratch_operands = 0 : i64, tpu.core_type = #tpu.core_type<tc>, window_params = [{transform_indices = @transform_0, window_bounds = array<i64: 1, 16, 256>}, {transform_indices = @transform_1, window_bounds = array<i64: 1, 16, 256>}, {transform_indices = @transform_2, window_bounds = array<i64: 1, 256, 128>}, {transform_indices = @transform_3, window_bounds = array<i64: 1, 256, 128>}, {transform_indices = @transform_4, window_bounds = array<i64: 1, 1, 256>}, {transform_indices = @transform_5, window_bounds = array<i64: 1, 1, 256>}, {transform_indices = @transform_6, window_bounds = array<i64: 2, 8, 128>}]} {
    %c0 = arith.constant 0 : index
    %c0_0 = arith.constant 0 : index
    %c0_1 = arith.constant 0 : index
    %0 = vector.load %arg2[%c0, %c0_0, %c0_1] : memref<1x16x256xf32, #tpu.memory_space<vmem>>, vector<1x16x256xf32>
    %1 = vector.shape_cast %0 : vector<1x16x256xf32> to vector<16x256xf32>
    %c0_2 = arith.constant 0 : index
    %c0_3 = arith.constant 0 : index
    %c0_4 = arith.constant 0 : index
    %2 = vector.load %arg3[%c0_2, %c0_3, %c0_4] : memref<1x16x256xf32, #tpu.memory_space<vmem>>, vector<1x16x256xf32>
    %3 = vector.shape_cast %2 : vector<1x16x256xf32> to vector<16x256xf32>
    %c0_i32 = arith.constant 0 : i32
    %c0_5 = arith.constant 0 : index
    %4 = arith.index_cast %c0_i32 : i32 to index
    %c0_6 = arith.constant 0 : index
    %5 = vector.load %arg6[%c0_5, %4, %c0_6] : memref<1x1x256xf32, #tpu.memory_space<vmem>>, vector<1x1x256xf32>
    %6 = vector.shape_cast %5 : vector<1x1x256xf32> to vector<1x256xf32>
    %c0_7 = arith.constant 0 : index
    %7 = arith.index_cast %c0_i32 : i32 to index
    %c0_8 = arith.constant 0 : index
    %8 = vector.load %arg7[%c0_7, %7, %c0_8] : memref<1x1x256xf32, #tpu.memory_space<vmem>>, vector<1x1x256xf32>
    %9 = vector.shape_cast %8 : vector<1x1x256xf32> to vector<1x256xf32>
    %10 = vector.broadcast %6 : vector<1x256xf32> to vector<16x256xf32>
    %11 = arith.mulf %1, %10 : vector<16x256xf32>
    %12 = vector.broadcast %9 : vector<1x256xf32> to vector<16x256xf32>
    %13 = arith.mulf %3, %12 : vector<16x256xf32>
    %14 = arith.subf %11, %13 : vector<16x256xf32>
    %15 = vector.broadcast %9 : vector<1x256xf32> to vector<16x256xf32>
    %16 = arith.mulf %1, %15 : vector<16x256xf32>
    %17 = vector.broadcast %6 : vector<1x256xf32> to vector<16x256xf32>
    %18 = arith.mulf %3, %17 : vector<16x256xf32>
    %19 = arith.addf %16, %18 : vector<16x256xf32>
    %cst = arith.constant 0.000000e+00 : f32
    %20 = vector.broadcast %cst : f32 to vector<16x256xf32>
    %21 = arith.subf %20, %19 : vector<16x256xf32>
    %c0_9 = arith.constant 0 : index
    %c0_10 = arith.constant 0 : index
    %c0_11 = arith.constant 0 : index
    %22 = vector.load %arg4[%c0_9, %c0_10, %c0_11] : memref<1x256x128xf32, #tpu.memory_space<vmem>>, vector<1x256x128xf32>
    %23 = vector.shape_cast %22 : vector<1x256x128xf32> to vector<256x128xf32>
    %cst_12 = arith.constant dense<0.000000e+00> : vector<16x128xf32>
    %24 = tpu.matmul %14, %23, %cst_12 {dimension_numbers = #tpu.dot_dimension_numbers<[1], [0], [0], [1], [0, 0, 1, 1], [], []>} : vector<16x256xf32>, vector<256x128xf32>, vector<16x128xf32> -> vector<16x128xf32>
    %c0_13 = arith.constant 0 : index
    %c0_14 = arith.constant 0 : index
    %c0_15 = arith.constant 0 : index
    %25 = vector.load %arg5[%c0_13, %c0_14, %c0_15] : memref<1x256x128xf32, #tpu.memory_space<vmem>>, vector<1x256x128xf32>
    %26 = vector.shape_cast %25 : vector<1x256x128xf32> to vector<256x128xf32>
    %cst_16 = arith.constant dense<0.000000e+00> : vector<16x128xf32>
    %27 = tpu.matmul %21, %26, %cst_16 {dimension_numbers = #tpu.dot_dimension_numbers<[1], [0], [0], [1], [0, 0, 1, 1], [], []>} : vector<16x256xf32>, vector<256x128xf32>, vector<16x128xf32> -> vector<16x128xf32>
    %28 = arith.addf %24, %27 : vector<16x128xf32>
    %c128_i32 = arith.constant 128 : i32
    %29 = arith.muli %c0_i32, %c128_i32 : i32
    %30 = tpu.assume_multiple %29, 128 : i32
    %31 = vector.shape_cast %28 : vector<16x128xf32> to vector<2x8x128xf32>
    %c0_17 = arith.constant 0 : index
    %c0_18 = arith.constant 0 : index
    %32 = arith.index_cast %30 : i32 to index
    %33 = vector.load %arg8[%c0_17, %c0_18, %32] : memref<2x8x128xf32, #tpu.memory_space<vmem>>, vector<2x8x128xf32>
    tpu.vector_store %arg8[%c0_17, %c0_18, %32], %31 {strides = array<i32>} : memref<2x8x128xf32, #tpu.memory_space<vmem>>, vector<2x8x128xf32>,
    %c1_i32 = arith.constant 1 : i32
    return
  }
  func.func @transform_0(%arg0: i32, %arg1: i32) -> (i32, i32, i32) {
    %c0_i32 = arith.constant 0 : i32
    %c0_i32_0 = arith.constant 0 : i32
    %c0_i32_1 = arith.constant 0 : i32
    return %arg0, %c0_i32, %c0_i32_0 : i32, i32, i32
  }
  func.func @transform_1(%arg0: i32, %arg1: i32) -> (i32, i32, i32) {
    %c0_i32 = arith.constant 0 : i32
    %c0_i32_0 = arith.constant 0 : i32
    %c0_i32_1 = arith.constant 0 : i32
    return %arg0, %c0_i32, %c0_i32_0 : i32, i32, i32
  }
  func.func @transform_2(%arg0: i32, %arg1: i32) -> (i32, i32, i32) {
    %c0_i32 = arith.constant 0 : i32
    %c0_i32_0 = arith.constant 0 : i32
    %c0_i32_1 = arith.constant 0 : i32
    return %arg0, %c0_i32, %c0_i32_0 : i32, i32, i32
  }
  func.func @transform_3(%arg0: i32, %arg1: i32) -> (i32, i32, i32) {
    %c0_i32 = arith.constant 0 : i32
    %c0_i32_0 = arith.constant 0 : i32
    %c0_i32_1 = arith.constant 0 : i32
    return %arg0, %c0_i32, %c0_i32_0 : i32, i32, i32
  }
  func.func @transform_4(%arg0: i32, %arg1: i32) -> (i32, i32, i32) {
    %c0_i32 = arith.constant 0 : i32
    %c0_i32_0 = arith.constant 0 : i32
    return %arg0, %arg1, %c0_i32 : i32, i32, i32
  }
  func.func @transform_5(%arg0: i32, %arg1: i32) -> (i32, i32, i32) {
    %c0_i32 = arith.constant 0 : i32
    %c0_i32_0 = arith.constant 0 : i32
    return %arg0, %arg1, %c0_i32 : i32, i32, i32
  }
  func.func @transform_6(%arg0: i32, %arg1: i32) -> (i32, i32, i32) {
    %c0_i32 = arith.constant 0 : i32
    %c0_i32_0 = arith.constant 0 : i32
    return %c0_i32, %arg0, %arg1 : i32, i32, i32
  }
}

</mosaic_0001>

<llo_original>
// kernel: tpu_custom_call.1
$region0: #{tpu_custom_call.1}
  #allocation0 [shape = 'u32[]', space=smem, size = 0x4, offset = 0x4, fixed_abs, tag = 'smem constant byte address 0x4 - core index']
  #allocation1 [shape = 'u32[72,128]{1,0:T(1,128)}', space=vmem, size = 0x9000, scoped, tag = 'internal scratch']
  %s0 = inlined_call_operand.hbm [shape: f32[1,16,256], index: 0, kind: input, shape index: {}]
  %s1 = inlined_call_operand.hbm [shape: f32[1,16,256], index: 1, kind: input, shape index: {}]
  %s2 = inlined_call_operand.hbm [shape: f32[1,256,128], index: 2, kind: input, shape index: {}]
  %s3 = inlined_call_operand.hbm [shape: f32[1,256,128], index: 3, kind: input, shape index: {}]
  %s4 = inlined_call_operand.vmem [shape: f32[1,1,256], index: 4, kind: input, shape index: {}]
  %s5 = inlined_call_operand.vmem [shape: f32[1,1,256], index: 5, kind: input, shape index: {}]
  %s6 = inlined_call_operand.hbm [shape: f32[2,8,128], index: 6, kind: output, shape index: {}]
  %s7 = sld [smem:[#allocation0]]
  $region50: #{tpu_custom_call.1} parent=0
    _
  %s9 = ssub.s32 1, %s7
  %s10 = scalar_select 0, %s9, %s7
  $region1: #{tpu_custom_call.1} parent=0
    #allocation2 [shape = 'u8[16384]{0}', space=vmem, size = 0x4000, scoped, tag = 'input window, operand 0, single buffered']
    #allocation3 [shape = 's32[1]{0}', space=sflag, size = 0x4, scoped, tag = 'scoped memory for tpu_custom_call.1']
    #allocation4 [shape = 's32[1]{0}', space=sflag, size = 0x4, scoped, tag = 'scoped memory for tpu_custom_call.1']
    #allocation5 [shape = 'u8[16384]{0}', space=vmem, size = 0x4000, scoped, tag = 'input window, operand 1, single buffered']
    #allocation6 [shape = 's32[1]{0}', space=sflag, size = 0x4, scoped, tag = 'scoped memory for tpu_custom_call.1']
    #allocation7 [shape = 'u8[131072]{0}', space=vmem, size = 0x20000, scoped, tag = 'input window, operand 2, single buffered']
    #allocation8 [shape = 'u8[131072]{0}', space=vmem, size = 0x20000, scoped, tag = 'input window, operand 3, single buffered']
    #allocation9 [shape = 's32[1]{0}', space=sflag, size = 0x4, scoped, tag = 'scoped memory for tpu_custom_call.1']
    #allocation10 [shape = 'u8[8192]{0}', space=vmem, size = 0x2000, scoped, tag = 'output window, operand 0, single buffered']
    %11 = vsyncpa [#allocation3], 0
    %12 = vsyncpa [#allocation6], 0
    %13 = vsyncpa [#allocation9], 0
    %14 = vsyncpa [#allocation4], 0
    // Predicated region
    $region2: #{tpu_custom_call.1} parent=1 // pred_check
      _
    $region3: #{tpu_custom_call.1} parent=1 // pred_check_branch
      %16 = sbr.rel (0) target = $region5
    $region4: #{tpu_custom_call.1} parent=1 // pred_region
      %18 = vsyncadd [#allocation3], 0
      %s19 = sshll.u32 %s0, 4
      %s20 = int_to_ptr.hbm [resolvable:$true] %s19
      %s21 = sshll.u32 [#allocation2], 4
      %s22 = int_to_ptr.vmem [resolvable:$true] %s21
      %27 = dma.hbm_to_vmem [thread:$0]  %s20, 512, %s22, [#allocation3], 256, 256, 16
    $region5: #{tpu_custom_call.1} parent=1 // pred_fallthru
      _
    // Predicated region
    $region6: #{tpu_custom_call.1} parent=1 // pred_check
      _
    $region7: #{tpu_custom_call.1} parent=1 // pred_check_branch
      %29 = sbr.rel (0) target = $region9
    $region8: #{tpu_custom_call.1} parent=1 // pred_region
      %31 = vsyncadd [#allocation6], 0
      %s32 = sshll.u32 %s1, 4
      %s33 = int_to_ptr.hbm [resolvable:$true] %s32
      %s34 = sshll.u32 [#allocation5], 4
      %s35 = int_to_ptr.vmem [resolvable:$true] %s34
      %40 = dma.hbm_to_vmem [thread:$0]  %s33, 512, %s35, [#allocation6], 256, 256, 16
    $region9: #{tpu_custom_call.1} parent=1 // pred_fallthru
      _
    // Predicated region
    $region10: #{tpu_custom_call.1} parent=1 // pred_check
      _
    $region11: #{tpu_custom_call.1} parent=1 // pred_check_branch
      %42 = sbr.rel (0) target = $region13
    $region12: #{tpu_custom_call.1} parent=1 // pred_region
      %44 = vsyncadd [#allocation6], 0
      %s45 = sshll.u32 %s2, 4
      %s46 = int_to_ptr.hbm [resolvable:$true] %s45
      %s47 = sshll.u32 [#allocation7], 4
      %s48 = int_to_ptr.vmem [resolvable:$true] %s47
      %53 = dma.hbm_to_vmem [thread:$0]  %s46, 4096, %s48, [#allocation6], 128, 128, 8
    $region13: #{tpu_custom_call.1} parent=1 // pred_fallthru
      _
    // Predicated region
    $region14: #{tpu_custom_call.1} parent=1 // pred_check
      _
    $region15: #{tpu_custom_call.1} parent=1 // pred_check_branch
      %55 = sbr.rel (0) target = $region17
    $region16: #{tpu_custom_call.1} parent=1 // pred_region
      %57 = vsyncadd [#allocation9], 0
      %s58 = sshll.u32 %s3, 4
      %s59 = int_to_ptr.hbm [resolvable:$true] %s58
      %s60 = sshll.u32 [#allocation8], 4
      %s61 = int_to_ptr.vmem [resolvable:$true] %s60
      %66 = dma.hbm_to_vmem [thread:$0]  %s59, 4096, %s61, [#allocation9], 128, 128, 8
    $region17: #{tpu_custom_call.1} parent=1 // pred_fallthru
      _
    // Predicated region
    $region18: #{tpu_custom_call.1} parent=1 // pred_check
      _
    $region19: #{tpu_custom_call.1} parent=1 // pred_check_branch
      %68 = sbr.rel (0) target = $region21
    $region20: #{tpu_custom_call.1} parent=1 // pred_region
      _
    $region21: #{tpu_custom_call.1} parent=1 // pred_fallthru
      _
    // Predicated region
    $region22: #{tpu_custom_call.1} parent=1 // pred_check
      _
    $region23: #{tpu_custom_call.1} parent=1 // pred_check_branch
      %70 = sbr.rel (0) target = $region25
    $region24: #{tpu_custom_call.1} parent=1 // pred_region
      _
    $region25: #{tpu_custom_call.1} parent=1 // pred_fallthru
      _
    // Predicated region
    $region26: #{tpu_custom_call.1} parent=1 // pred_check
      _
    $region27: #{tpu_custom_call.1} parent=1 // pred_check_branch
      %72 = sbr.rel (0) target = $region29
    $region28: #{tpu_custom_call.1} parent=1 // pred_region
      %74 = dma.done [#allocation3], 512
    $region29: #{tpu_custom_call.1} parent=1 // pred_fallthru
      _
    // Predicated region
    $region30: #{tpu_custom_call.1} parent=1 // pred_check
      _
    $region31: #{tpu_custom_call.1} parent=1 // pred_check_branch
      %76 = sbr.rel (0) target = $region33
    $region32: #{tpu_custom_call.1} parent=1 // pred_region
      %78 = dma.done [#allocation6], 512
    $region33: #{tpu_custom_call.1} parent=1 // pred_fallthru
      _
    // Predicated region
    $region34: #{tpu_custom_call.1} parent=1 // pred_check
      _
    $region35: #{tpu_custom_call.1} parent=1 // pred_check_branch
      %80 = sbr.rel (0) target = $region37
    $region36: #{tpu_custom_call.1} parent=1 // pred_region
      %82 = dma.done [#allocation6], 4096
    $region37: #{tpu_custom_call.1} parent=1 // pred_fallthru
      _
    // Predicated region
    $region38: #{tpu_custom_call.1} parent=1 // pred_check
      _
    $region39: #{tpu_custom_call.1} parent=1 // pred_check_branch
      %84 = sbr.rel (0) target = $region41
    $region40: #{tpu_custom_call.1} parent=1 // pred_region
      %86 = dma.done [#allocation9], 4096
    $region41: #{tpu_custom_call.1} parent=1 // pred_fallthru
      _
    %v87 = vld [vmem:[#allocation2] sm:$0xff]
    %v88 = vld [vmem:[#allocation2 + $0x8] sm:$0xff]
    %v89 = vld [vmem:[#allocation2 + $0x10] sm:$0xff]
    %v90 = vld [vmem:[#allocation2 + $0x18] sm:$0xff]
    %v91 = vld [vmem:[#allocation5] sm:$0xff]
    %v92 = vld [vmem:[#allocation5 + $0x8] sm:$0xff]
    %v93 = vld [vmem:[#allocation5 + $0x10] sm:$0xff]
    %v94 = vld [vmem:[#allocation5 + $0x18] sm:$0xff]
    %v95 = vld [vmem:[%s4] sm:$0x3]
    %v96 = vld [vmem:[%s5] sm:$0x3]
    %v98 = vperm.slane %v95, 0
    %v99 = vperm.slane %v95, 1
    %v102 = vmul.f32 %v87, %v98
    %v103 = vmul.f32 %v88, %v99
    %v104 = vmul.f32 %v89, %v98
    %v105 = vmul.f32 %v90, %v99
    %v107 = vperm.slane %v96, 0
    %v108 = vperm.slane %v96, 1
    %v111 = vmul.f32 %v91, %v107
    %v112 = vmul.f32 %v92, %v108
    %v113 = vmul.f32 %v93, %v107
    %v114 = vmul.f32 %v94, %v108
    %v115 = vsub.f32 %v102, %v111
    %v116 = vsub.f32 %v103, %v112
    %v117 = vsub.f32 %v104, %v113
    %v118 = vsub.f32 %v105, %v114
    %v119 = vmul.f32 %v87, %v107
    %v120 = vmul.f32 %v88, %v108
    %v121 = vmul.f32 %v89, %v107
    %v122 = vmul.f32 %v90, %v108
    %v123 = vmul.f32 %v91, %v98
    %v124 = vmul.f32 %v92, %v99
    %v125 = vmul.f32 %v93, %v98
    %v126 = vmul.f32 %v94, %v99
    %v127 = vadd.f32 %v119, %v123
    %v128 = vadd.f32 %v120, %v124
    %v129 = vadd.f32 %v121, %v125
    %v130 = vadd.f32 %v122, %v126
    %v131 = vsub.f32 0.0, %v127
    %v132 = vsub.f32 0.0, %v128
    %v133 = vsub.f32 0.0, %v129
    %v134 = vsub.f32 0.0, %v130
    %v135 = vld [vmem:[#allocation7] sm:$0xff]
    %v136 = vld [vmem:[#allocation7 + $0x8] sm:$0xff]
    %v137 = vld [vmem:[#allocation7 + $0x10] sm:$0xff]
    %v138 = vld [vmem:[#allocation7 + $0x18] sm:$0xff]
    %v139 = vld [vmem:[#allocation7 + $0x20] sm:$0xff]
    %v140 = vld [vmem:[#allocation7 + $0x28] sm:$0xff]
    %v141 = vld [vmem:[#allocation7 + $0x30] sm:$0xff]
    %v142 = vld [vmem:[#allocation7 + $0x38] sm:$0xff]
    %v143 = vld [vmem:[#allocation7 + $0x40] sm:$0xff]
    %v144 = vld [vmem:[#allocation7 + $0x48] sm:$0xff]
    %v145 = vld [vmem:[#allocation7 + $0x50] sm:$0xff]
    %v146 = vld [vmem:[#allocation7 + $0x58] sm:$0xff]
    %v147 = vld [vmem:[#allocation7 + $0x60] sm:$0xff]
    %v148 = vld [vmem:[#allocation7 + $0x68] sm:$0xff]
    %v149 = vld [vmem:[#allocation7 + $0x70] sm:$0xff]
    %v150 = vld [vmem:[#allocation7 + $0x78] sm:$0xff]
    %v151 = vld [vmem:[#allocation7 + $0x80] sm:$0xff]
    %v152 = vld [vmem:[#allocation7 + $0x88] sm:$0xff]
    %v153 = vld [vmem:[#allocation7 + $0x90] sm:$0xff]
    %v154 = vld [vmem:[#allocation7 + $0x98] sm:$0xff]
    %v155 = vld [vmem:[#allocation7 + $0xa0] sm:$0xff]
    %v156 = vld [vmem:[#allocation7 + $0xa8] sm:$0xff]
    %v157 = vld [vmem:[#allocation7 + $0xb0] sm:$0xff]
    %v158 = vld [vmem:[#allocation7 + $0xb8] sm:$0xff]
    %v159 = vld [vmem:[#allocation7 + $0xc0] sm:$0xff]
    %v160 = vld [vmem:[#allocation7 + $0xc8] sm:$0xff]
    %v161 = vld [vmem:[#allocation7 + $0xd0] sm:$0xff]
    %v162 = vld [vmem:[#allocation7 + $0xd8] sm:$0xff]
    %v163 = vld [vmem:[#allocation7 + $0xe0] sm:$0xff]
    %v164 = vld [vmem:[#allocation7 + $0xe8] sm:$0xff]
    %v165 = vld [vmem:[#allocation7 + $0xf0] sm:$0xff]
    %v166 = vld [vmem:[#allocation7 + $0xf8] sm:$0xff]
    %v167 = vld [vmem:[#allocation8] sm:$0xff]
    %v168 = vld [vmem:[#allocation8 + $0x8] sm:$0xff]
    %v169 = vld [vmem:[#allocation8 + $0x10] sm:$0xff]
    %v170 = vld [vmem:[#allocation8 + $0x18] sm:$0xff]
    %v171 = vld [vmem:[#allocation8 + $0x20] sm:$0xff]
    %v172 = vld [vmem:[#allocation8 + $0x28] sm:$0xff]
    %v173 = vld [vmem:[#allocation8 + $0x30] sm:$0xff]
    %v174 = vld [vmem:[#allocation8 + $0x38] sm:$0xff]
    %v175 = vld [vmem:[#allocation8 + $0x40] sm:$0xff]
    %v176 = vld [vmem:[#allocation8 + $0x48] sm:$0xff]
    %v177 = vld [vmem:[#allocation8 + $0x50] sm:$0xff]
    %v178 = vld [vmem:[#allocation8 + $0x58] sm:$0xff]
    %v179 = vld [vmem:[#allocation8 + $0x60] sm:$0xff]
    %v180 = vld [vmem:[#allocation8 + $0x68] sm:$0xff]
    %v181 = vld [vmem:[#allocation8 + $0x70] sm:$0xff]
    %v182 = vld [vmem:[#allocation8 + $0x78] sm:$0xff]
    %v183 = vld [vmem:[#allocation8 + $0x80] sm:$0xff]
    %v184 = vld [vmem:[#allocation8 + $0x88] sm:$0xff]
    %v185 = vld [vmem:[#allocation8 + $0x90] sm:$0xff]
    %v186 = vld [vmem:[#allocation8 + $0x98] sm:$0xff]
    %v187 = vld [vmem:[#allocation8 + $0xa0] sm:$0xff]
    %v188 = vld [vmem:[#allocation8 + $0xa8] sm:$0xff]
    %v189 = vld [vmem:[#allocation8 + $0xb0] sm:$0xff]
    %v190 = vld [vmem:[#allocation8 + $0xb8] sm:$0xff]
    %v191 = vld [vmem:[#allocation8 + $0xc0] sm:$0xff]
    %v192 = vld [vmem:[#allocation8 + $0xc8] sm:$0xff]
    %v193 = vld [vmem:[#allocation8 + $0xd0] sm:$0xff]
    %v194 = vld [vmem:[#allocation8 + $0xd8] sm:$0xff]
    %v195 = vld [vmem:[#allocation8 + $0xe0] sm:$0xff]
    %v196 = vld [vmem:[#allocation8 + $0xe8] sm:$0xff]
    %v197 = vld [vmem:[#allocation8 + $0xf0] sm:$0xff]
    %v198 = vld [vmem:[#allocation8 + $0xf8] sm:$0xff]
    %199 = vmatpush.msra.mxu0 %v182
    %200 = vmatpush.msra.mxu0 %v181
    %201 = vmatpush.msra.mxu0 %v180
    %202 = vmatpush.msra.mxu0 %v179
    %203 = vmatpush.msra.mxu0 %v178
    %204 = vmatpush.msra.mxu0 %v177
    %205 = vmatpush.msra.mxu0 %v176
    %206 = vmatpush.msra.mxu0 %v175
    %207 = vmatpush.msra.mxu0 %v174
    %208 = vmatpush.msra.mxu0 %v173
    %209 = vmatpush.msra.mxu0 %v172
    %210 = vmatpush.msra.mxu0 %v171
    %211 = vmatpush.msra.mxu0 %v170
    %212 = vmatpush.msra.mxu0 %v169
    %213 = vmatpush.msra.mxu0 %v168
    %214 = vmatpush.msra.mxu0 %v167
    %215 = vmatmul.f32.gmra.mxu0 %v131
    %v216 = vpop.f32.mrf.mxu0
    %v217 = vadd.f32 0.0, %v216
    %218 = vmatmul.f32.gmra.mxu0 %v133
    %v219 = vpop.f32.mrf.mxu0
    %v220 = vadd.f32 0.0, %v219
    %221 = vdwg.mxu0
    %222 = vmatpush.msra.mxu0 %v198
    %223 = vmatpush.msra.mxu0 %v197
    %224 = vmatpush.msra.mxu0 %v196
    %225 = vmatpush.msra.mxu0 %v195
    %226 = vmatpush.msra.mxu0 %v194
    %227 = vmatpush.msra.mxu0 %v193
    %228 = vmatpush.msra.mxu0 %v192
    %229 = vmatpush.msra.mxu0 %v191
    %230 = vmatpush.msra.mxu0 %v190
    %231 = vmatpush.msra.mxu0 %v189
    %232 = vmatpush.msra.mxu0 %v188
    %233 = vmatpush.msra.mxu0 %v187
    %234 = vmatpush.msra.mxu0 %v186
    %235 = vmatpush.msra.mxu0 %v185
    %236 = vmatpush.msra.mxu0 %v184
    %237 = vmatpush.msra.mxu0 %v183
    %238 = vmatmul.f32.gmra.mxu0 %v132
    %v239 = vpop.f32.mrf.mxu0
    %v240 = vadd.f32 %v217, %v239
    %241 = vmatmul.f32.gmra.mxu0 %v134
    %v242 = vpop.f32.mrf.mxu0
    %v243 = vadd.f32 %v220, %v242
    %244 = vdwg.mxu0
    %245 = vmatpush.msra.mxu0 %v150
    %246 = vmatpush.msra.mxu0 %v149
    %247 = vmatpush.msra.mxu0 %v148
    %248 = vmatpush.msra.mxu0 %v147
    %249 = vmatpush.msra.mxu0 %v146
    %250 = vmatpush.msra.mxu0 %v145
    %251 = vmatpush.msra.mxu0 %v144
    %252 = vmatpush.msra.mxu0 %v143
    %253 = vmatpush.msra.mxu0 %v142
    %254 = vmatpush.msra.mxu0 %v141
    %255 = vmatpush.msra.mxu0 %v140
    %256 = vmatpush.msra.mxu0 %v139
    %257 = vmatpush.msra.mxu0 %v138
    %258 = vmatpush.msra.mxu0 %v137
    %259 = vmatpush.msra.mxu0 %v136
    %260 = vmatpush.msra.mxu0 %v135
    %261 = vmatmul.f32.gmra.mxu0 %v115
    %v262 = vpop.f32.mrf.mxu0
    %v263 = vadd.f32 %v240, %v262
    %264 = vmatmul.f32.gmra.mxu0 %v117
    %v265 = vpop.f32.mrf.mxu0
    %v266 = vadd.f32 %v243, %v265
    %267 = vdwg.mxu0
    %268 = vmatpush.msra.mxu0 %v166
    %269 = vmatpush.msra.mxu0 %v165
    %270 = vmatpush.msra.mxu0 %v164
    %271 = vmatpush.msra.mxu0 %v163
    %272 = vmatpush.msra.mxu0 %v162
    %273 = vmatpush.msra.mxu0 %v161
    %274 = vmatpush.msra.mxu0 %v160
    %275 = vmatpush.msra.mxu0 %v159
    %276 = vmatpush.msra.mxu0 %v158
    %277 = vmatpush.msra.mxu0 %v157
    %278 = vmatpush.msra.mxu0 %v156
    %279 = vmatpush.msra.mxu0 %v155
    %280 = vmatpush.msra.mxu0 %v154
    %281 = vmatpush.msra.mxu0 %v153
    %282 = vmatpush.msra.mxu0 %v152
    %283 = vmatpush.msra.mxu0 %v151
    %284 = vmatmul.f32.gmra.mxu0 %v116
    %v285 = vpop.f32.mrf.mxu0
    %v286 = vadd.f32 %v263, %v285
    %287 = vmatmul.f32.gmra.mxu0 %v118
    %v288 = vpop.f32.mrf.mxu0
    %v289 = vadd.f32 %v266, %v288
    %290 = vdwg.mxu0
    %291 = vst [vmem:[#allocation10] sm:$0xff] %v286
    %292 = vst [vmem:[#allocation10 + $0x8] sm:$0xff] %v289
    // Predicated region
    $region42: #{tpu_custom_call.1} parent=1 // pred_check
      _
    $region43: #{tpu_custom_call.1} parent=1 // pred_check_branch
      %294 = sbr.rel (0) target = $region45
    $region44: #{tpu_custom_call.1} parent=1 // pred_region
      %296 = vsyncadd [#allocation4], 0
      %s297 = sshll.u32 [#allocation10], 4
      %s298 = int_to_ptr.vmem [resolvable:$true] %s297
      %s299 = sshll.u32 %s6, 4
      %s300 = int_to_ptr.hbm [resolvable:$true] %s299
      %305 = dma.vmem_to_hbm [thread:$0]  %s298, 256, %s300, [#allocation4], 128, 128, 8
    $region45: #{tpu_custom_call.1} parent=1 // pred_fallthru
      _
    // Predicated region
    $region46: #{tpu_custom_call.1} parent=1 // pred_check
      _
    $region47: #{tpu_custom_call.1} parent=1 // pred_check_branch
      %307 = sbr.rel (0) target = $region49
    $region48: #{tpu_custom_call.1} parent=1 // pred_region
      %309 = dma.done [#allocation4], 256
    $region49: #{tpu_custom_call.1} parent=1 // pred_fallthru
      _
    %310 = vsyncpa [#allocation3], 1
    %311 = vsyncpa [#allocation6], 1
    %312 = vsyncpa [#allocation9], 1
    %313 = vsyncpa [#allocation4], 1

</llo_original>
